<compile_context>
chip_gen: v7x
topology: tpu7x:2x2x1
jax: 0.10.0
libtpu: 0.0.40
codegen_flags: <defaults>
</compile_context>

<pallas_src>
import jax
import jax.numpy as jnp
from jax.experimental import pallas as pl
from jax.experimental.pallas import tpu as pltpu

BN_EPS = 1e-5


def _round_up(v, m):
    return ((v + m - 1) // m) * m


def classifier_kernel(x_ref, w1_ref, shift_ref, w2_ref, b2_ref, fc1_ref, logit_ref):
    # fc1: Linear(256 -> 32) with BatchNorm1d (eval) and bias folded into (w1, shift), then ReLU.
    mm_dtype = w1_ref.dtype
    h = jnp.dot(x_ref[...].astype(mm_dtype), w1_ref[...],
                preferred_element_type=jnp.float32)
    fc1 = jnp.maximum(h + shift_ref[...], 0.0)
    # TODO(synk): training-mode Dropout, the fc1_emb.mul_(sqrt(1-p)) rescale and BN batch
    # statistics are training-only; this kernel implements the eval forward.
    fc1_ref[...] = fc1.astype(fc1_ref.dtype)

    # fc2: Linear(32 -> class_num).
    logit = jnp.dot(fc1.astype(w2_ref.dtype), w2_ref[...],
                    preferred_element_type=jnp.float32)
    logit_ref[...] = (logit + b2_ref[...]).astype(logit_ref.dtype)


def res_classifier_forward(x, params, *, block_b=2048, use_bf16=True):
    """x: (B, 256) f32 or bf16. Returns (fc1_emb (B, 32) f32, logit (B, class_num) f32)."""
    w1, b1, gamma, beta, run_mean, run_var, w2, b2 = params
    B, F = x.shape
    H = w1.shape[1]
    C = w2.shape[1]

    # Fold eval-mode BatchNorm + fc1 bias into the weight columns and a single shift (f32, once).
    scale = gamma / jnp.sqrt(run_var + BN_EPS)            # (H,)
    shift = ((b1 - run_mean) * scale + beta).reshape(1, H)  # (1, H), stays f32 in-kernel
    w1f = w1 * scale                                       # per-output-column scale
    b2r = b2.reshape(1, C)

    mm_dtype = jnp.bfloat16 if use_bf16 else jnp.float32
    w1c = w1f.astype(mm_dtype)
    w2c = w2.astype(mm_dtype)

    # Batch tile: multiple of 8, at least 2 grid blocks for B > 8 (v7x megacore),
    # no padding of x — Pallas handles the ragged final block (masked writeback).
    tb = max(8, min(block_b, _round_up(pl.cdiv(B, 2), 8)))
    grid = (pl.cdiv(B, tb),)

    cost = pl.CostEstimate(
        flops=2 * B * (F * H + H * C),
        transcendentals=0,
        bytes_accessed=int(B * F * x.dtype.itemsize
                           + B * (H + C) * 4
                           + (w1c.size + w2c.size) * w1c.dtype.itemsize
                           + (shift.size + b2r.size) * 4),
    )

    fc1, logit = pl.pallas_call(
        classifier_kernel,
        out_shape=(jax.ShapeDtypeStruct((B, H), jnp.float32),
                   jax.ShapeDtypeStruct((B, C), jnp.float32)),
        grid=grid,
        in_specs=[
            pl.BlockSpec((tb, F), lambda i: (i, 0)),   # x: streamed per batch tile
            pl.BlockSpec((F, H), lambda i: (0, 0)),    # folded w1: resident in VMEM
            pl.BlockSpec((1, H), lambda i: (0, 0)),    # folded shift
            pl.BlockSpec((H, C), lambda i: (0, 0)),    # w2: resident in VMEM
            pl.BlockSpec((1, C), lambda i: (0, 0)),    # b2
        ],
        out_specs=(pl.BlockSpec((tb, H), lambda i: (i, 0)),
                   pl.BlockSpec((tb, C), lambda i: (i, 0))),
        compiler_params=pltpu.CompilerParams(
            dimension_semantics=("parallel",),
            vmem_limit_bytes=48 * 1024 * 1024,   # fits v7x's 64 MiB VMEM with headroom
        ),
        cost_estimate=cost,
    )(x, w1c, shift, w2c, b2r)

    return fc1, logit


def init_params(key, in_dim=256, hidden=32, class_num=5):
    """Deterministic synthetic params. PyTorch Linear weight (out, in) stored as (in, out)."""
    ks = jax.random.split(key, 8)
    bound1 = 1.0 / jnp.sqrt(jnp.float32(in_dim))
    w1 = jax.random.uniform(ks[0], (in_dim, hidden), jnp.float32, -bound1, bound1)
    b1 = jax.random.uniform(ks[1], (hidden,), jnp.float32, -bound1, bound1)
    gamma = jax.random.uniform(ks[2], (hidden,), jnp.float32, 0.5, 1.5)
    beta = 0.1 * jax.random.normal(ks[3], (hidden,), jnp.float32)
    run_mean = 0.1 * jax.random.normal(ks[4], (hidden,), jnp.float32)
    run_var = jax.random.uniform(ks[5], (hidden,), jnp.float32, 0.5, 1.5)
    bound2 = 1.0 / jnp.sqrt(jnp.float32(hidden))
    w2 = jax.random.uniform(ks[6], (hidden, class_num), jnp.float32, -bound2, bound2)
    b2 = jax.random.uniform(ks[7], (class_num,), jnp.float32, -bound2, bound2)
    return (w1, b1, gamma, beta, run_mean, run_var, w2, b2)


def reference_forward_f32(x, params):
    """Pure-JAX f32 reference matching the PyTorch eval forward exactly (no folding, no bf16)."""
    w1, b1, gamma, beta, run_mean, run_var, w2, b2 = params
    h = jnp.dot(x, w1, preferred_element_type=jnp.float32) + b1
    h = (h - run_mean) / jnp.sqrt(run_var + BN_EPS) * gamma + beta
    fc1 = jnp.maximum(h, 0.0)
    logit = jnp.dot(fc1, w2, preferred_element_type=jnp.float32) + b2
    return fc1, logit


if __name__ == "__main__":
    key = jax.random.PRNGKey(0)
    kx, kx2, kp = jax.random.split(key, 3)
    params = init_params(kp)

    # --- f32 path: bit-faithful to the PyTorch eval forward (tight tolerance). ---
    B = 8
    x = jax.random.normal(kx, (B, 256), jnp.float32)
    fc1, logit = jax.block_until_ready(
        res_classifier_forward(x, params, use_bf16=False))
    rfc1, rlogit = reference_forward_f32(x, params)
    assert fc1.shape == (B, 32) and logit.shape == (B, 5), (fc1.shape, logit.shape)
    assert jnp.allclose(fc1, rfc1, atol=1e-4, rtol=1e-4), "f32 fc1_emb mismatch"
    assert jnp.allclose(logit, rlogit, atol=1e-4, rtol=1e-4), "f32 logit mismatch"

    # --- bf16 weight path vs f32 reference (documents the bf16 deviation). ---
    fc1_b, logit_b = jax.block_until_ready(
        res_classifier_forward(x, params, use_bf16=True))
    assert jnp.allclose(fc1_b, rfc1, atol=3e-2, rtol=3e-2), "bf16 fc1_emb mismatch"
    assert jnp.allclose(logit_b, rlogit, atol=3e-2, rtol=3e-2), "bf16 logit mismatch"

    # --- Ragged batch: grid=(2,), last block partial (no jnp.pad, masked writeback). ---
    B2 = 200
    x2 = jax.random.normal(kx2, (B2, 256), jnp.float32)
    fc1_2, logit_2 = jax.block_until_ready(
        res_classifier_forward(x2, params, block_b=128, use_bf16=False))
    rfc1_2, rlogit_2 = reference_forward_f32(x2, params)
    assert fc1_2.shape == (B2, 32) and logit_2.shape == (B2, 5)
    assert jnp.allclose(fc1_2, rfc1_2, atol=1e-4, rtol=1e-4), "ragged fc1_emb mismatch"
    assert jnp.allclose(logit_2, rlogit_2, atol=1e-4, rtol=1e-4), "ragged logit mismatch"

    print("KERNEL_OK")
</pallas_src>

<mosaic_0001>
module attributes {stable_mosaic.version = 11 : i64} {
  func.func @classifier_kernel(%arg0: i32, %arg1: memref<8x256xf32, #tpu.memory_space<vmem>>, %arg2: memref<256x32xf32, #tpu.memory_space<vmem>>, %arg3: memref<1x32xf32, #tpu.memory_space<vmem>>, %arg4: memref<32x5xf32, #tpu.memory_space<vmem>>, %arg5: memref<1x5xf32, #tpu.memory_space<vmem>>, %arg6: memref<8x32xf32, #tpu.memory_space<vmem>>, %arg7: memref<8x5xf32, #tpu.memory_space<vmem>>) attributes {dimension_semantics = [#tpu.dimension_semantics<parallel>], iteration_bounds = array<i64: 1>, scalar_prefetch = 0 : i64, scratch_operands = 0 : i64, tpu.core_type = #tpu.core_type<tc>, window_params = [{transform_indices = @transform_0, window_bounds = array<i64: 8, 256>}, {pipeline_mode = #tpu.pipeline_mode<synchronous>, transform_indices = @transform_1, window_bounds = array<i64: 256, 32>}, {pipeline_mode = #tpu.pipeline_mode<synchronous>, transform_indices = @transform_2, window_bounds = array<i64: 1, 32>}, {pipeline_mode = #tpu.pipeline_mode<synchronous>, transform_indices = @transform_3, window_bounds = array<i64: 32, 5>}, {pipeline_mode = #tpu.pipeline_mode<synchronous>, transform_indices = @transform_4, window_bounds = array<i64: 1, 5>}, {transform_indices = @transform_5, window_bounds = array<i64: 8, 32>}, {transform_indices = @transform_6, window_bounds = array<i64: 8, 5>}]} {
    %c0 = arith.constant 0 : index
    %c0_0 = arith.constant 0 : index
    %0 = vector.load %arg1[%c0, %c0_0] : memref<8x256xf32, #tpu.memory_space<vmem>>, vector<8x256xf32>
    %c0_1 = arith.constant 0 : index
    %c0_2 = arith.constant 0 : index
    %1 = vector.load %arg2[%c0_1, %c0_2] : memref<256x32xf32, #tpu.memory_space<vmem>>, vector<256x32xf32>
    %cst = arith.constant dense<0.000000e+00> : vector<8x32xf32>
    %2 = tpu.matmul %0, %1, %cst {dimension_numbers = #tpu.dot_dimension_numbers<[1], [0], [0], [1], [0, 0, 1, 1], [], []>} : vector<8x256xf32>, vector<256x32xf32>, vector<8x32xf32> -> vector<8x32xf32>
    %c0_3 = arith.constant 0 : index
    %c0_4 = arith.constant 0 : index
    %3 = vector.load %arg3[%c0_3, %c0_4] : memref<1x32xf32, #tpu.memory_space<vmem>>, vector<1x32xf32>
    %4 = vector.broadcast %3 : vector<1x32xf32> to vector<8x32xf32>
    %5 = arith.addf %2, %4 : vector<8x32xf32>
    %cst_5 = arith.constant 0.000000e+00 : f32
    %6 = vector.broadcast %cst_5 : f32 to vector<8x32xf32>
    %7 = arith.maximumf %5, %6 : vector<8x32xf32>
    %c0_6 = arith.constant 0 : index
    %c0_7 = arith.constant 0 : index
    %8 = vector.load %arg6[%c0_6, %c0_7] : memref<8x32xf32, #tpu.memory_space<vmem>>, vector<8x32xf32>
    tpu.vector_store %arg6[%c0_6, %c0_7], %7 {strides = array<i32>} : memref<8x32xf32, #tpu.memory_space<vmem>>, vector<8x32xf32>,
    %c0_8 = arith.constant 0 : index
    %c0_9 = arith.constant 0 : index
    %9 = vector.load %arg4[%c0_8, %c0_9] : memref<32x5xf32, #tpu.memory_space<vmem>>, vector<32x5xf32>
    %cst_10 = arith.constant dense<0.000000e+00> : vector<8x5xf32>
    %10 = tpu.matmul %7, %9, %cst_10 {dimension_numbers = #tpu.dot_dimension_numbers<[1], [0], [0], [1], [0, 0, 1, 1], [], []>} : vector<8x32xf32>, vector<32x5xf32>, vector<8x5xf32> -> vector<8x5xf32>
    %c0_11 = arith.constant 0 : index
    %c0_12 = arith.constant 0 : index
    %11 = vector.load %arg5[%c0_11, %c0_12] : memref<1x5xf32, #tpu.memory_space<vmem>>, vector<1x5xf32>
    %12 = vector.broadcast %11 : vector<1x5xf32> to vector<8x5xf32>
    %13 = arith.addf %10, %12 : vector<8x5xf32>
    %c0_13 = arith.constant 0 : index
    %c0_14 = arith.constant 0 : index
    %14 = vector.load %arg7[%c0_13, %c0_14] : memref<8x5xf32, #tpu.memory_space<vmem>>, vector<8x5xf32>
    tpu.vector_store %arg7[%c0_13, %c0_14], %13 {strides = array<i32>} : memref<8x5xf32, #tpu.memory_space<vmem>>, vector<8x5xf32>,
    return
  }
  func.func @transform_0(%arg0: i32) -> (i32, i32) {
    %c0_i32 = arith.constant 0 : i32
    %c0_i32_0 = arith.constant 0 : i32
    return %arg0, %c0_i32 : i32, i32
  }
  func.func @transform_1(%arg0: i32) -> (i32, i32) {
    %c0_i32 = arith.constant 0 : i32
    %c0_i32_0 = arith.constant 0 : i32
    %c0_i32_1 = arith.constant 0 : i32
    return %c0_i32, %c0_i32_0 : i32, i32
  }
  func.func @transform_2(%arg0: i32) -> (i32, i32) {
    %c0_i32 = arith.constant 0 : i32
    %c0_i32_0 = arith.constant 0 : i32
    %c0_i32_1 = arith.constant 0 : i32
    return %c0_i32, %c0_i32_0 : i32, i32
  }
  func.func @transform_3(%arg0: i32) -> (i32, i32) {
    %c0_i32 = arith.constant 0 : i32
    %c0_i32_0 = arith.constant 0 : i32
    %c0_i32_1 = arith.constant 0 : i32
    return %c0_i32, %c0_i32_0 : i32, i32
  }
  func.func @transform_4(%arg0: i32) -> (i32, i32) {
    %c0_i32 = arith.constant 0 : i32
    %c0_i32_0 = arith.constant 0 : i32
    %c0_i32_1 = arith.constant 0 : i32
    return %c0_i32, %c0_i32_0 : i32, i32
  }
  func.func @transform_5(%arg0: i32) -> (i32, i32) {
    %c0_i32 = arith.constant 0 : i32
    %c0_i32_0 = arith.constant 0 : i32
    return %arg0, %c0_i32 : i32, i32
  }
  func.func @transform_6(%arg0: i32) -> (i32, i32) {
    %c0_i32 = arith.constant 0 : i32
    %c0_i32_0 = arith.constant 0 : i32
    return %arg0, %c0_i32 : i32, i32
  }
}

</mosaic_0001>

<llo_original>
// kernel: tpu_custom_call.1
$region0: #{tpu_custom_call.1}
  #allocation0 [shape = 'u32[]', space=smem, size = 0x4, offset = 0x4, fixed_abs, tag = 'smem constant byte address 0x4 - core index']
  #allocation1 [shape = 'u32[144,128]{1,0:T(1,128)}', space=vmem, size = 0x12000, scoped, tag = 'internal scratch']
  %s0 = inlined_call_operand.vmem [shape: f32[8,256], index: 0, kind: input, shape index: {}]
  %s1 = inlined_call_operand.vmem [shape: f32[256,32], index: 1, kind: input, shape index: {}]
  %s2 = inlined_call_operand.vmem [shape: f32[1,32], index: 2, kind: input, shape index: {}]
  %s3 = inlined_call_operand.vmem [shape: f32[32,5], index: 3, kind: input, shape index: {}]
  %s4 = inlined_call_operand.vmem [shape: f32[1,5], index: 4, kind: input, shape index: {}]
  %s5 = inlined_call_operand.hbm [shape: f32[8,32], index: 5, kind: output, shape index: {0}]
  %s6 = inlined_call_operand.hbm [shape: f32[8,5], index: 6, kind: output, shape index: {1}]
  %7 = xla_tuple %s5, %s6
  %s8 = sld [smem:[#allocation0]]
  $region38: #{tpu_custom_call.1} parent=0
    _
  %s10 = ssub.s32 1, %s8
  %s11 = scalar_select 0, %s10, %s8
  $region1: #{tpu_custom_call.1} parent=0
    #allocation2 [shape = 'u8[4096]{0}', space=vmem, size = 0x1000, scoped, tag = 'output window, operand 0, single buffered']
    #allocation3 [shape = 's32[1]{0}', space=sflag, size = 0x4, scoped, tag = 'scoped memory for tpu_custom_call.1']
    #allocation4 [shape = 'u8[4096]{0}', space=vmem, size = 0x1000, scoped, tag = 'output window, operand 1, single buffered']
    #allocation5 [shape = 's32[1]{0}', space=sflag, size = 0x4, scoped, tag = 'scoped memory for tpu_custom_call.1']
    %12 = vsyncpa [#allocation3], 0
    %13 = vsyncpa [#allocation5], 0
    // Predicated region
    $region2: #{tpu_custom_call.1} parent=1 // pred_check
      _
    $region3: #{tpu_custom_call.1} parent=1 // pred_check_branch
      %15 = sbr.rel (0) target = $region5
    $region4: #{tpu_custom_call.1} parent=1 // pred_region
      _
    $region5: #{tpu_custom_call.1} parent=1 // pred_fallthru
      _
    // Predicated region
    $region6: #{tpu_custom_call.1} parent=1 // pred_check
      _
    $region7: #{tpu_custom_call.1} parent=1 // pred_check_branch
      %17 = sbr.rel (0) target = $region9
    $region8: #{tpu_custom_call.1} parent=1 // pred_region
      _
    $region9: #{tpu_custom_call.1} parent=1 // pred_fallthru
      _
    // Predicated region
    $region10: #{tpu_custom_call.1} parent=1 // pred_check
      _
    $region11: #{tpu_custom_call.1} parent=1 // pred_check_branch
      %19 = sbr.rel (0) target = $region13
    $region12: #{tpu_custom_call.1} parent=1 // pred_region
      _
    $region13: #{tpu_custom_call.1} parent=1 // pred_fallthru
      _
    // Predicated region
    $region14: #{tpu_custom_call.1} parent=1 // pred_check
      _
    $region15: #{tpu_custom_call.1} parent=1 // pred_check_branch
      %21 = sbr.rel (0) target = $region17
    $region16: #{tpu_custom_call.1} parent=1 // pred_region
      _
    $region17: #{tpu_custom_call.1} parent=1 // pred_fallthru
      _
    // Predicated region
    $region18: #{tpu_custom_call.1} parent=1 // pred_check
      _
    $region19: #{tpu_custom_call.1} parent=1 // pred_check_branch
      %23 = sbr.rel (0) target = $region21
    $region20: #{tpu_custom_call.1} parent=1 // pred_region
      _
    $region21: #{tpu_custom_call.1} parent=1 // pred_fallthru
      _
    %v24 = vld [vmem:[%s0] sm:$0xff]
    %v25 = vld [vmem:[%s0 + $0x8] sm:$0xff]
    %v26 = vld [vmem:[%s1] sm:$0xff]
    %v27 = vld [vmem:[%s1 + $0x8] sm:$0xff]
    %v28 = vld [vmem:[%s1 + $0x10] sm:$0xff]
    %v29 = vld [vmem:[%s1 + $0x18] sm:$0xff]
    %v30 = vld [vmem:[%s1 + $0x20] sm:$0xff]
    %v31 = vld [vmem:[%s1 + $0x28] sm:$0xff]
    %v32 = vld [vmem:[%s1 + $0x30] sm:$0xff]
    %v33 = vld [vmem:[%s1 + $0x38] sm:$0xff]
    %v34 = vld [vmem:[%s1 + $0x40] sm:$0xff]
    %v35 = vld [vmem:[%s1 + $0x48] sm:$0xff]
    %v36 = vld [vmem:[%s1 + $0x50] sm:$0xff]
    %v37 = vld [vmem:[%s1 + $0x58] sm:$0xff]
    %v38 = vld [vmem:[%s1 + $0x60] sm:$0xff]
    %v39 = vld [vmem:[%s1 + $0x68] sm:$0xff]
    %v40 = vld [vmem:[%s1 + $0x70] sm:$0xff]
    %v41 = vld [vmem:[%s1 + $0x78] sm:$0xff]
    %v42 = vld [vmem:[%s1 + $0x80] sm:$0xff]
    %v43 = vld [vmem:[%s1 + $0x88] sm:$0xff]
    %v44 = vld [vmem:[%s1 + $0x90] sm:$0xff]
    %v45 = vld [vmem:[%s1 + $0x98] sm:$0xff]
    %v46 = vld [vmem:[%s1 + $0xa0] sm:$0xff]
    %v47 = vld [vmem:[%s1 + $0xa8] sm:$0xff]
    %v48 = vld [vmem:[%s1 + $0xb0] sm:$0xff]
    %v49 = vld [vmem:[%s1 + $0xb8] sm:$0xff]
    %v50 = vld [vmem:[%s1 + $0xc0] sm:$0xff]
    %v51 = vld [vmem:[%s1 + $0xc8] sm:$0xff]
    %v52 = vld [vmem:[%s1 + $0xd0] sm:$0xff]
    %v53 = vld [vmem:[%s1 + $0xd8] sm:$0xff]
    %v54 = vld [vmem:[%s1 + $0xe0] sm:$0xff]
    %v55 = vld [vmem:[%s1 + $0xe8] sm:$0xff]
    %v56 = vld [vmem:[%s1 + $0xf0] sm:$0xff]
    %v57 = vld [vmem:[%s1 + $0xf8] sm:$0xff]
    %v58 = vld [vmem:[%s2] sm:$0x1]
    %v60 = vlaneseq
    %v61 = vshrl.u32 %v60, 7
    %v62 = vsub.s32 0, %v61
    %v63 = vrot.slane %v58, %v62
    %65 = vmatprep.subr.mxu0 0.0
    %66 = vmatpush1.msra.mxu0 %v26
    %67 = vmatprep.subr.mxu0 0.0
    %68 = vmatpush1.msra.mxu0 %v27
    %69 = vmatprep.subr.mxu0 0.0
    %70 = vmatpush1.msra.mxu0 %v28
    %71 = vmatprep.subr.mxu0 0.0
    %72 = vmatpush1.msra.mxu0 %v29
    %73 = vmatprep.subr.mxu0 0.0
    %74 = vmatpush1.msra.mxu0 %v30
    %75 = vmatprep.subr.mxu0 0.0
    %76 = vmatpush1.msra.mxu0 %v31
    %77 = vmatprep.subr.mxu0 0.0
    %78 = vmatpush1.msra.mxu0 %v32
    %79 = vmatprep.subr.mxu0 0.0
    %80 = vmatpush1.msra.mxu0 %v33
    %81 = vmatprep.subr.mxu0 0.0
    %82 = vmatpush1.msra.mxu0 %v34
    %83 = vmatprep.subr.mxu0 0.0
    %84 = vmatpush1.msra.mxu0 %v35
    %85 = vmatprep.subr.mxu0 0.0
    %86 = vmatpush1.msra.mxu0 %v36
    %87 = vmatprep.subr.mxu0 0.0
    %88 = vmatpush1.msra.mxu0 %v37
    %89 = vmatprep.subr.mxu0 0.0
    %90 = vmatpush1.msra.mxu0 %v38
    %91 = vmatprep.subr.mxu0 0.0
    %92 = vmatpush1.msra.mxu0 %v39
    %93 = vmatprep.subr.mxu0 0.0
    %94 = vmatpush1.msra.mxu0 %v40
    %95 = vmatprep.subr.mxu0 0.0
    %96 = vmatpush1.msra.mxu0 %v41
    %97 = vmatprep.subr.mxu0 0.0
    %98 = vmatpush1.msra.mxu0 %v42
    %99 = vmatprep.subr.mxu0 0.0
    %100 = vmatpush1.msra.mxu0 %v43
    %101 = vmatprep.subr.mxu0 0.0
    %102 = vmatpush1.msra.mxu0 %v44
    %103 = vmatprep.subr.mxu0 0.0
    %104 = vmatpush1.msra.mxu0 %v45
    %105 = vmatprep.subr.mxu0 0.0
    %106 = vmatpush1.msra.mxu0 %v46
    %107 = vmatprep.subr.mxu0 0.0
    %108 = vmatpush1.msra.mxu0 %v47
    %109 = vmatprep.subr.mxu0 0.0
    %110 = vmatpush1.msra.mxu0 %v48
    %111 = vmatprep.subr.mxu0 0.0
    %112 = vmatpush1.msra.mxu0 %v49
    %113 = vmatprep.subr.mxu0 0.0
    %114 = vmatpush1.msra.mxu0 %v50
    %115 = vmatprep.subr.mxu0 0.0
    %116 = vmatpush1.msra.mxu0 %v51
    %117 = vmatprep.subr.mxu0 0.0
    %118 = vmatpush1.msra.mxu0 %v52
    %119 = vmatprep.subr.mxu0 0.0
    %120 = vmatpush1.msra.mxu0 %v53
    %121 = vmatprep.subr.mxu0 0.0
    %122 = vmatpush1.msra.mxu0 %v54
    %123 = vmatprep.subr.mxu0 0.0
    %124 = vmatpush1.msra.mxu0 %v55
    %125 = vmatprep.subr.mxu0 0.0
    %126 = vmatpush1.msra.mxu0 %v56
    %127 = vmatprep.subr.mxu0 0.0
    %128 = vmatpush1.msra.mxu0 %v57
    %129 = vmatprep.mubr.f32.mxu0 %v25
    %130 = vmatmul.mubr.f32.gmra.mrb[0].mxu0 %v24
    %v131 = vpop.f32.mrb[0].mxu0
    %v132 = vadd.f32 %v63, %v131
    %v133 = vpop.f32.mrb[0].mxu0
    %134 = vdwg.mxu0
    %v135 = vmax.f32 %v132, 0.0
    %vm136 = vcmask 261120
    %137 = vst.msk [vmem:[#allocation2] sm:$0xff] %vm136, %v135
    %v138 = vld [vmem:[%s3] sm:$0xff]
    %v139 = vld [vmem:[%s3 + $0x8] sm:$0xff]
    %v140 = vld [vmem:[%s3 + $0x10] sm:$0xff]
    %v141 = vld [vmem:[%s3 + $0x18] sm:$0xff]
    %v142 = vld [vmem:[%s4] sm:$0x1]
    %v144 = vlaneseq
    %v145 = vshrl.u32 %v144, 7
    %v146 = vsub.s32 0, %v145
    %v147 = vrot.slane %v142, %v146
    %v150 = vsel %vm136, %v135, 0
    %152 = vmatprep.subr.mxu0 0.0
    %153 = vmatpush1.msra.mxu0 %v138
    %154 = vmatprep.subr.mxu0 0.0
    %155 = vmatpush1.msra.mxu0 %v139
    %156 = vmatprep.subr.mxu0 0.0
    %157 = vmatpush1.msra.mxu0 %v140
    %158 = vmatprep.subr.mxu0 0.0
    %159 = vmatpush1.msra.mxu0 %v141
    %160 = vmatprep.subr.mxu0 0.0
    %161 = vmatpush1.msra.mxu0 0.0
    %162 = vmatprep.subr.mxu0 0.0
    %163 = vmatpush1.msra.mxu0 0.0
    %164 = vmatprep.subr.mxu0 0.0
    %165 = vmatpush1.msra.mxu0 0.0
    %166 = vmatprep.subr.mxu0 0.0
    %167 = vmatpush1.msra.mxu0 0.0
    %168 = vmatprep.subr.mxu0 0.0
    %169 = vmatpush1.msra.mxu0 0.0
    %170 = vmatprep.subr.mxu0 0.0
    %171 = vmatpush1.msra.mxu0 0.0
    %172 = vmatprep.subr.mxu0 0.0
    %173 = vmatpush1.msra.mxu0 0.0
    %174 = vmatprep.subr.mxu0 0.0
    %175 = vmatpush1.msra.mxu0 0.0
    %176 = vmatprep.subr.mxu0 0.0
    %177 = vmatpush1.msra.mxu0 0.0
    %178 = vmatprep.subr.mxu0 0.0
    %179 = vmatpush1.msra.mxu0 0.0
    %180 = vmatprep.subr.mxu0 0.0
    %181 = vmatpush1.msra.mxu0 0.0
    %182 = vmatprep.subr.mxu0 0.0
    %183 = vmatpush1.msra.mxu0 0.0
    %184 = vmatprep.subr.mxu0 0.0
    %185 = vmatpush1.msra.mxu0 0.0
    %186 = vmatprep.subr.mxu0 0.0
    %187 = vmatpush1.msra.mxu0 0.0
    %188 = vmatprep.subr.mxu0 0.0
    %189 = vmatpush1.msra.mxu0 0.0
    %190 = vmatprep.subr.mxu0 0.0
    %191 = vmatpush1.msra.mxu0 0.0
    %192 = vmatprep.subr.mxu0 0.0
    %193 = vmatpush1.msra.mxu0 0.0
    %194 = vmatprep.subr.mxu0 0.0
    %195 = vmatpush1.msra.mxu0 0.0
    %196 = vmatprep.subr.mxu0 0.0
    %197 = vmatpush1.msra.mxu0 0.0
    %198 = vmatprep.subr.mxu0 0.0
    %199 = vmatpush1.msra.mxu0 0.0
    %200 = vmatprep.subr.mxu0 0.0
    %201 = vmatpush1.msra.mxu0 0.0
    %202 = vmatprep.subr.mxu0 0.0
    %203 = vmatpush1.msra.mxu0 0.0
    %204 = vmatprep.subr.mxu0 0.0
    %205 = vmatpush1.msra.mxu0 0.0
    %206 = vmatprep.subr.mxu0 0.0
    %207 = vmatpush1.msra.mxu0 0.0
    %208 = vmatprep.subr.mxu0 0.0
    %209 = vmatpush1.msra.mxu0 0.0
    %210 = vmatprep.subr.mxu0 0.0
    %211 = vmatpush1.msra.mxu0 0.0
    %212 = vmatprep.subr.mxu0 0.0
    %213 = vmatpush1.msra.mxu0 0.0
    %214 = vmatprep.subr.mxu0 0.0
    %215 = vmatpush1.msra.mxu0 0.0
    %216 = vmatprep.mubr.f32.mxu0 0.0
    %217 = vmatmul.mubr.f32.gmra.mrb[0].mxu0 %v150
    %v218 = vpop.f32.mrb[0].mxu0
    %v219 = vadd.f32 %v147, %v218
    %v220 = vpop.f32.mrb[0].mxu0
    %221 = vdwg.mxu0
    %vm222 = vcmask 39936
    %223 = vst.msk [vmem:[#allocation4] sm:$0xff] %vm222, %v219
    // Predicated region
    $region22: #{tpu_custom_call.1} parent=1 // pred_check
      _
    $region23: #{tpu_custom_call.1} parent=1 // pred_check_branch
      %225 = sbr.rel (0) target = $region25
    $region24: #{tpu_custom_call.1} parent=1 // pred_region
      %s227 = ssub.s32 128, 128
      %228 = vsyncadd [#allocation3], %s227
      %s230 = sshll.u32 [#allocation2], 4
      %s231 = int_to_ptr.vmem [resolvable:$true] %s230
      %233 = dma.vmem_to_hbm [thread:$0]  %s231, 128, %s5, [#allocation3]
    $region25: #{tpu_custom_call.1} parent=1 // pred_fallthru
      _
    // Predicated region
    $region26: #{tpu_custom_call.1} parent=1 // pred_check
      _
    $region27: #{tpu_custom_call.1} parent=1 // pred_check_branch
      %235 = sbr.rel (0) target = $region29
    $region28: #{tpu_custom_call.1} parent=1 // pred_region
      %s237 = ssub.s32 128, 128
      %238 = vsyncadd [#allocation5], %s237
      %s240 = sshll.u32 [#allocation4], 4
      %s241 = int_to_ptr.vmem [resolvable:$true] %s240
      %243 = dma.vmem_to_hbm [thread:$0]  %s241, 128, %s6, [#allocation5]
    $region29: #{tpu_custom_call.1} parent=1 // pred_fallthru
      _
    // Predicated region
    $region30: #{tpu_custom_call.1} parent=1 // pred_check
      _
    $region31: #{tpu_custom_call.1} parent=1 // pred_check_branch
      %245 = sbr.rel (0) target = $region33
    $region32: #{tpu_custom_call.1} parent=1 // pred_region
      %246 = dma.done [#allocation3], 128
    $region33: #{tpu_custom_call.1} parent=1 // pred_fallthru
      _
    // Predicated region
    $region34: #{tpu_custom_call.1} parent=1 // pred_check
      _
    $region35: #{tpu_custom_call.1} parent=1 // pred_check_branch
      %248 = sbr.rel (0) target = $region37
    $region36: #{tpu_custom_call.1} parent=1 // pred_region
      %249 = dma.done [#allocation5], 128
    $region37: #{tpu_custom_call.1} parent=1 // pred_fallthru
      _
    %250 = vsyncpa [#allocation3], 1
    %251 = vsyncpa [#allocation5], 1

</llo_original>
